<compile_context>
chip_gen: v7x
topology: tpu7x:2x2x1
jax: 0.10.0
libtpu: 0.0.40
codegen_flags: <defaults>
</compile_context>

<pallas_src>
import functools

import jax
import jax.numpy as jnp
from jax.experimental import pallas as pl
from jax.experimental.pallas import tpu as pltpu


MATMUL_DTYPE = jnp.bfloat16   # MXU operand dtype (f32 accumulate)
LANE = 128                    # lane width / MXU tile alignment


def _round_up(n, m):
    return ((n + m - 1) // m) * m


def _cdiv(a, b):
    return (a + b - 1) // b


def _vmem_limit_bytes():
    # ~3/4 of physical VMEM: 96 MiB on v5e/v6e (128 MiB), 48 MiB on v7x (64 MiB).
    try:
        cap = pltpu.get_tpu_info().vmem_capacity_bytes
    except Exception:
        cap = 64 * 1024 * 1024
    return int(min(cap * 3 // 4, 100 * 1024 * 1024))


_VMEM_LIMIT_BYTES = _vmem_limit_bytes()


def _resident(shape):
    """Full-array VMEM-resident BlockSpec (same block at every grid step)."""
    nd = len(shape)
    return pl.BlockSpec(shape, lambda i: (0,) * nd)


def _batch_tiles(b, block_b):
    """Pick a sublane-friendly batch tile; force >=2 grid steps when possible
    so the 'parallel' axis can shard across both TensorCores on v7x."""
    tb = min(block_b, _round_up(b, 8))
    if b >= 16 and tb >= _round_up(b, 8):
        tb = _round_up(_cdiv(b, 2), 8)
    bp = _round_up(b, tb)
    return tb, bp, bp // tb


# -----------------------------------------------------------------------------
# Kernels
# -----------------------------------------------------------------------------
def _vae_forward_kernel(
    x_ref, eps_ref,
    w1_ref, b1_ref, wmulv_ref, bmulv_ref,
    wd1_ref, bd1_ref, wd2_ref, bd2_ref,
    xr_ref, mulv_ref,
    *, lp,
):
    # ---- Encoder: fc1 + relu (x already bf16; f32 accumulate) ----
    x = x_ref[...]                                                   # (TB, D_in) bf16
    h = jnp.dot(x, w1_ref[...], preferred_element_type=jnp.float32) + b1_ref[...]
    h = jnp.maximum(h, 0.0)

    # ---- Fused, lane-dense mu|logvar head: (Hp, 2*lp) matmul, (TB, 2*lp) slab ----
    mulv = jnp.dot(h.astype(wmulv_ref.dtype), wmulv_ref[...],
                   preferred_element_type=jnp.float32) + bmulv_ref[...]
    mu = mulv[:, :lp]          # lane-aligned split (lp is a multiple of 128)
    logvar = mulv[:, lp:]

    # ---- Reparameterize (f32 elementwise): z = mu + eps * exp(0.5*logvar) ----
    std = jnp.exp(0.5 * logvar)
    z = mu + eps_ref[...] * std                                      # (TB, lp) f32

    # ---- Decoder: fc1 + relu, fc2 ----
    hd = jnp.dot(z.astype(wd1_ref.dtype), wd1_ref[...],
                 preferred_element_type=jnp.float32) + bd1_ref[...]
    hd = jnp.maximum(hd, 0.0)
    xr = jnp.dot(hd.astype(wd2_ref.dtype), wd2_ref[...],
                 preferred_element_type=jnp.float32) + bd2_ref[...]

    xr_ref[...] = xr.astype(xr_ref.dtype)                            # bf16 store
    mulv_ref[...] = mulv                                             # f32, lane-dense


def _decoder_kernel(z_ref, wd1_ref, bd1_ref, wd2_ref, bd2_ref, out_ref):
    h = jnp.dot(z_ref[...], wd1_ref[...],
                preferred_element_type=jnp.float32) + bd1_ref[...]
    h = jnp.maximum(h, 0.0)
    out = jnp.dot(h.astype(wd2_ref.dtype), wd2_ref[...],
                  preferred_element_type=jnp.float32) + bd2_ref[...]
    out_ref[...] = out.astype(out_ref.dtype)


# -----------------------------------------------------------------------------
# One-time parameter preparation (hoisted out of the per-call wrappers)
# -----------------------------------------------------------------------------
def prepare_params(params):
    """Pad hidden/latent dims to lane multiples, fuse + lane-align the mu|logvar
    head, and cast MXU weights to bf16. Biases stay f32."""
    d_in, h = params["w1"].shape
    l = params["wmu"].shape[1]
    hp, lp = _round_up(h, LANE), _round_up(l, LANE)

    def pad2(a, r, c):
        return jnp.pad(a, ((0, r - a.shape[0]), (0, c - a.shape[1])))

    w1 = pad2(params["w1"], d_in, hp).astype(MATMUL_DTYPE)
    b1 = pad2(params["b1"], 1, hp)
    wmulv = jnp.concatenate(
        [pad2(params["wmu"], hp, lp), pad2(params["wlv"], hp, lp)], axis=1
    ).astype(MATMUL_DTYPE)                                           # (Hp, 2*Lp)
    bmulv = jnp.concatenate(
        [pad2(params["bmu"], 1, lp), pad2(params["blv"], 1, lp)], axis=1)
    wd1 = pad2(params["wd1"], lp, hp).astype(MATMUL_DTYPE)
    bd1 = pad2(params["bd1"], 1, hp)
    wd2 = pad2(params["wd2"], hp, d_in).astype(MATMUL_DTYPE)
    bd2 = params["bd2"]
    return dict(w1=w1, b1=b1, wmulv=wmulv, bmulv=bmulv,
                wd1=wd1, bd1=bd1, wd2=wd2, bd2=bd2)


# -----------------------------------------------------------------------------
# Wrappers
# -----------------------------------------------------------------------------
@functools.partial(jax.jit, static_argnames=("block_b",))
def vae_forward(x, eps, prepped, *, block_b=512):
    """forward_vae: returns (x_reconstructed [bf16], mu, logvar)."""
    B, D_in = x.shape
    L = eps.shape[1]
    Lp = prepped["wmulv"].shape[1] // 2

    tb, bp, steps = _batch_tiles(B, block_b)
    x_p = jnp.pad(x.astype(MATMUL_DTYPE), ((0, bp - B), (0, 0)))
    eps_p = jnp.pad(eps, ((0, bp - B), (0, Lp - L)))

    kernel = functools.partial(_vae_forward_kernel, lp=Lp)
    out_shapes = (
        jax.ShapeDtypeStruct((bp, D_in), MATMUL_DTYPE),   # x_reconstructed (bf16 stream)
        jax.ShapeDtypeStruct((bp, 2 * Lp), jnp.float32),  # mu | logvar lane-dense slab
    )
    in_specs = [
        pl.BlockSpec((tb, D_in), lambda i: (i, 0)),       # x: batch-tiled bf16
        pl.BlockSpec((tb, Lp), lambda i: (i, 0)),         # eps: batch-tiled f32
        _resident(prepped["w1"].shape), _resident(prepped["b1"].shape),
        _resident(prepped["wmulv"].shape), _resident(prepped["bmulv"].shape),
        _resident(prepped["wd1"].shape), _resident(prepped["bd1"].shape),
        _resident(prepped["wd2"].shape), _resident(prepped["bd2"].shape),
    ]
    out_specs = (
        pl.BlockSpec((tb, D_in), lambda i: (i, 0)),
        pl.BlockSpec((tb, 2 * Lp), lambda i: (i, 0)),
    )
    xr, mulv = pl.pallas_call(
        kernel,
        grid=(steps,),
        out_shape=out_shapes,
        in_specs=in_specs,
        out_specs=out_specs,
        compiler_params=pltpu.CompilerParams(
            dimension_semantics=("parallel",),
            vmem_limit_bytes=_VMEM_LIMIT_BYTES),
    )(x_p, eps_p, prepped["w1"], prepped["b1"], prepped["wmulv"], prepped["bmulv"],
      prepped["wd1"], prepped["bd1"], prepped["wd2"], prepped["bd2"])

    return xr[:B], mulv[:B, :L], mulv[:B, Lp:Lp + L]


@functools.partial(jax.jit, static_argnames=("block_n",))
def decode(z, prepped, *, block_n=512):
    """Decoder.forward: used by generate_augmented_data (one call for all N)."""
    N, L = z.shape
    Lp = prepped["wd1"].shape[0]
    D_out = prepped["wd2"].shape[1]

    tn, n_pad, steps = _batch_tiles(N, block_n)
    z_p = jnp.pad(z.astype(MATMUL_DTYPE), ((0, n_pad - N), (0, Lp - L)))

    out = pl.pallas_call(
        _decoder_kernel,
        grid=(steps,),
        out_shape=jax.ShapeDtypeStruct((n_pad, D_out), jnp.float32),
        in_specs=[
            pl.BlockSpec((tn, Lp), lambda i: (i, 0)),
            _resident(prepped["wd1"].shape), _resident(prepped["bd1"].shape),
            _resident(prepped["wd2"].shape), _resident(prepped["bd2"].shape),
        ],
        out_specs=pl.BlockSpec((tn, D_out), lambda i: (i, 0)),
        compiler_params=pltpu.CompilerParams(
            dimension_semantics=("parallel",),
            vmem_limit_bytes=_VMEM_LIMIT_BYTES),
    )(z_p, prepped["wd1"], prepped["bd1"], prepped["wd2"], prepped["bd2"])
    return out[:N]


# -----------------------------------------------------------------------------
# Deterministic parameter init (matches nn.Linear shapes; uniform(-1/sqrt(fan_in)))
# -----------------------------------------------------------------------------
def init_params(key, input_dim, hidden_dim, latent_dim):
    def linear(key, fan_in, fan_out):
        kw, kb = jax.random.split(key)
        bound = 1.0 / jnp.sqrt(fan_in)
        w = jax.random.uniform(kw, (fan_in, fan_out), jnp.float32, -bound, bound)
        b = jax.random.uniform(kb, (1, fan_out), jnp.float32, -bound, bound)
        return w, b

    keys = jax.random.split(key, 5)
    w1, b1 = linear(keys[0], input_dim, hidden_dim)       # encoder.fc1
    wmu, bmu = linear(keys[1], hidden_dim, latent_dim)    # encoder.fc2_mu
    wlv, blv = linear(keys[2], hidden_dim, latent_dim)    # encoder.fc2_logvar
    wd1, bd1 = linear(keys[3], latent_dim, hidden_dim)    # decoder.fc1
    wd2, bd2 = linear(keys[4], hidden_dim, input_dim)     # decoder.fc2
    return dict(w1=w1, b1=b1, wmu=wmu, bmu=bmu, wlv=wlv, blv=blv,
                wd1=wd1, bd1=bd1, wd2=wd2, bd2=bd2)


def loss_function(x, x_reconstructed, mu, logvar):
    diff = x_reconstructed.astype(jnp.float32) - x.astype(jnp.float32)
    recon_loss = jnp.sum(diff * diff)
    kl = -0.5 * jnp.sum(1.0 + logvar - mu**2 - jnp.exp(logvar))
    return recon_loss + kl


def vae_forward_ref(x, eps, params):
    """Pure-JAX f32 reference of forward_vae (for tolerance check)."""
    h = jnp.maximum(x @ params["w1"] + params["b1"], 0.0)
    mu = h @ params["wmu"] + params["bmu"]
    logvar = h @ params["wlv"] + params["blv"]
    z = mu + eps * jnp.exp(0.5 * logvar)
    hd = jnp.maximum(z @ params["wd1"] + params["bd1"], 0.0)
    xr = hd @ params["wd2"] + params["bd2"]
    return xr, mu, logvar


# -----------------------------------------------------------------------------
# Main
# -----------------------------------------------------------------------------
if __name__ == "__main__":
    # Small shapes consistent with the module: waveforms (B, T, C) flattened
    # to (B, T*C) = (B, input_dim); augmented data reshaped back to (N, T, C).
    B, T, C = 4, 16, 8            # original code uses (·, 256, 22); scaled down
    input_dim = T * C             # 128
    hidden_dim = 64
    latent_dim = 16
    num_samples = 4

    key = jax.random.PRNGKey(0)
    k_params, k_wave, k_eps, k_z = jax.random.split(key, 4)

    params = init_params(k_params, input_dim, hidden_dim, latent_dim)
    prepped = prepare_params(params)          # hoisted one-time weight prep

    waveforms = jax.random.normal(k_wave, (B, T, C), jnp.float32)
    x = waveforms.reshape(B, -1)              # view(B, -1)

    # One forward_vae pass through the fused, batch-tiled Pallas kernel.
    eps = jax.random.normal(k_eps, (B, latent_dim), jnp.float32)
    x_recon, mu, logvar = vae_forward(x, eps, prepped)
    loss = loss_function(x, x_recon, mu, logvar)

    # generate_augmented_data: all samples decoded in ONE pallas_call,
    # reshaped to (N, T, C).
    z = jax.random.normal(k_z, (num_samples, latent_dim), jnp.float32)
    augmented = decode(z, prepped).reshape(num_samples, T, C)

    jax.block_until_ready((x_recon, mu, logvar, loss, augmented))

    # Correctness vs. f32 pure-JAX reference (loose tolerance for bf16 MXU ops).
    xr_ref, mu_ref, lv_ref = vae_forward_ref(x, eps, params)
    assert float(jnp.max(jnp.abs(x_recon.astype(jnp.float32) - xr_ref))) < 0.1
    assert float(jnp.max(jnp.abs(mu - mu_ref))) < 0.1
    assert float(jnp.max(jnp.abs(logvar - lv_ref))) < 0.1

    assert augmented.shape == (num_samples, T, C)
    assert x_recon.shape == (B, input_dim)
    assert mu.shape == (B, latent_dim) and logvar.shape == (B, latent_dim)
    assert bool(jnp.isfinite(loss))
    assert bool(jnp.all(jnp.isfinite(augmented)))
    print("KERNEL_OK")
</pallas_src>

<mosaic_0001>
module attributes {stable_mosaic.version = 11 : i64} {
  func.func @_vae_forward_kernel(%arg0: i32, %arg1: memref<8x128xbf16, #tpu.memory_space<vmem>>, %arg2: memref<8x128xf32, #tpu.memory_space<vmem>>, %arg3: memref<128x128xbf16, #tpu.memory_space<vmem>>, %arg4: memref<1x128xf32, #tpu.memory_space<vmem>>, %arg5: memref<128x256xbf16, #tpu.memory_space<vmem>>, %arg6: memref<1x256xf32, #tpu.memory_space<vmem>>, %arg7: memref<128x128xbf16, #tpu.memory_space<vmem>>, %arg8: memref<1x128xf32, #tpu.memory_space<vmem>>, %arg9: memref<128x128xbf16, #tpu.memory_space<vmem>>, %arg10: memref<1x128xf32, #tpu.memory_space<vmem>>, %arg11: memref<8x128xbf16, #tpu.memory_space<vmem>>, %arg12: memref<8x256xf32, #tpu.memory_space<vmem>>) attributes {dimension_semantics = [#tpu.dimension_semantics<parallel>], iteration_bounds = array<i64: 1>, scalar_prefetch = 0 : i64, scratch_operands = 0 : i64, tpu.core_type = #tpu.core_type<tc>, window_params = [{transform_indices = @transform_0, window_bounds = array<i64: 8, 128>}, {transform_indices = @transform_1, window_bounds = array<i64: 8, 128>}, {pipeline_mode = #tpu.pipeline_mode<synchronous>, transform_indices = @transform_2, window_bounds = array<i64: 128, 128>}, {pipeline_mode = #tpu.pipeline_mode<synchronous>, transform_indices = @transform_3, window_bounds = array<i64: 1, 128>}, {pipeline_mode = #tpu.pipeline_mode<synchronous>, transform_indices = @transform_4, window_bounds = array<i64: 128, 256>}, {pipeline_mode = #tpu.pipeline_mode<synchronous>, transform_indices = @transform_5, window_bounds = array<i64: 1, 256>}, {pipeline_mode = #tpu.pipeline_mode<synchronous>, transform_indices = @transform_6, window_bounds = array<i64: 128, 128>}, {pipeline_mode = #tpu.pipeline_mode<synchronous>, transform_indices = @transform_7, window_bounds = array<i64: 1, 128>}, {pipeline_mode = #tpu.pipeline_mode<synchronous>, transform_indices = @transform_8, window_bounds = array<i64: 128, 128>}, {pipeline_mode = #tpu.pipeline_mode<synchronous>, transform_indices = @transform_9, window_bounds = array<i64: 1, 128>}, {transform_indices = @transform_10, window_bounds = array<i64: 8, 128>}, {transform_indices = @transform_11, window_bounds = array<i64: 8, 256>}]} {
    %c0 = arith.constant 0 : index
    %c0_0 = arith.constant 0 : index
    %0 = vector.load %arg1[%c0, %c0_0] : memref<8x128xbf16, #tpu.memory_space<vmem>>, vector<8x128xbf16>
    %c0_1 = arith.constant 0 : index
    %c0_2 = arith.constant 0 : index
    %1 = vector.load %arg3[%c0_1, %c0_2] : memref<128x128xbf16, #tpu.memory_space<vmem>>, vector<128x128xbf16>
    %cst = arith.constant dense<0.000000e+00> : vector<8x128xf32>
    %2 = tpu.matmul %0, %1, %cst {dimension_numbers = #tpu.dot_dimension_numbers<[1], [0], [0], [1], [0, 0, 1, 1], [], []>} : vector<8x128xbf16>, vector<128x128xbf16>, vector<8x128xf32> -> vector<8x128xf32>
    %c0_3 = arith.constant 0 : index
    %c0_4 = arith.constant 0 : index
    %3 = vector.load %arg4[%c0_3, %c0_4] : memref<1x128xf32, #tpu.memory_space<vmem>>, vector<1x128xf32>
    %4 = vector.broadcast %3 : vector<1x128xf32> to vector<8x128xf32>
    %5 = arith.addf %2, %4 : vector<8x128xf32>
    %cst_5 = arith.constant 0.000000e+00 : f32
    %6 = vector.broadcast %cst_5 : f32 to vector<8x128xf32>
    %7 = arith.maximumf %5, %6 : vector<8x128xf32>
    %8 = arith.truncf %7 : vector<8x128xf32> to vector<8x128xbf16>
    %c0_6 = arith.constant 0 : index
    %c0_7 = arith.constant 0 : index
    %9 = vector.load %arg5[%c0_6, %c0_7] : memref<128x256xbf16, #tpu.memory_space<vmem>>, vector<128x256xbf16>
    %cst_8 = arith.constant dense<0.000000e+00> : vector<8x256xf32>
    %10 = tpu.matmul %8, %9, %cst_8 {dimension_numbers = #tpu.dot_dimension_numbers<[1], [0], [0], [1], [0, 0, 1, 1], [], []>} : vector<8x128xbf16>, vector<128x256xbf16>, vector<8x256xf32> -> vector<8x256xf32>
    %c0_9 = arith.constant 0 : index
    %c0_10 = arith.constant 0 : index
    %11 = vector.load %arg6[%c0_9, %c0_10] : memref<1x256xf32, #tpu.memory_space<vmem>>, vector<1x256xf32>
    %12 = vector.broadcast %11 : vector<1x256xf32> to vector<8x256xf32>
    %13 = arith.addf %10, %12 : vector<8x256xf32>
    %14 = vector.extract_strided_slice %13 {offsets = [0, 0], sizes = [8, 128], strides = [1, 1]} : vector<8x256xf32> to vector<8x128xf32>
    %15 = vector.extract_strided_slice %13 {offsets = [0, 128], sizes = [8, 128], strides = [1, 1]} : vector<8x256xf32> to vector<8x128xf32>
    %cst_11 = arith.constant 5.000000e-01 : f32
    %16 = vector.broadcast %cst_11 : f32 to vector<8x128xf32>
    %17 = arith.mulf %16, %15 : vector<8x128xf32>
    %18 = math.exp %17 : vector<8x128xf32>
    %c0_12 = arith.constant 0 : index
    %c0_13 = arith.constant 0 : index
    %19 = vector.load %arg2[%c0_12, %c0_13] : memref<8x128xf32, #tpu.memory_space<vmem>>, vector<8x128xf32>
    %20 = arith.mulf %19, %18 : vector<8x128xf32>
    %21 = arith.addf %14, %20 : vector<8x128xf32>
    %22 = arith.truncf %21 : vector<8x128xf32> to vector<8x128xbf16>
    %c0_14 = arith.constant 0 : index
    %c0_15 = arith.constant 0 : index
    %23 = vector.load %arg7[%c0_14, %c0_15] : memref<128x128xbf16, #tpu.memory_space<vmem>>, vector<128x128xbf16>
    %cst_16 = arith.constant dense<0.000000e+00> : vector<8x128xf32>
    %24 = tpu.matmul %22, %23, %cst_16 {dimension_numbers = #tpu.dot_dimension_numbers<[1], [0], [0], [1], [0, 0, 1, 1], [], []>} : vector<8x128xbf16>, vector<128x128xbf16>, vector<8x128xf32> -> vector<8x128xf32>
    %c0_17 = arith.constant 0 : index
    %c0_18 = arith.constant 0 : index
    %25 = vector.load %arg8[%c0_17, %c0_18] : memref<1x128xf32, #tpu.memory_space<vmem>>, vector<1x128xf32>
    %26 = vector.broadcast %25 : vector<1x128xf32> to vector<8x128xf32>
    %27 = arith.addf %24, %26 : vector<8x128xf32>
    %cst_19 = arith.constant 0.000000e+00 : f32
    %28 = vector.broadcast %cst_19 : f32 to vector<8x128xf32>
    %29 = arith.maximumf %27, %28 : vector<8x128xf32>
    %30 = arith.truncf %29 : vector<8x128xf32> to vector<8x128xbf16>
    %c0_20 = arith.constant 0 : index
    %c0_21 = arith.constant 0 : index
    %31 = vector.load %arg9[%c0_20, %c0_21] : memref<128x128xbf16, #tpu.memory_space<vmem>>, vector<128x128xbf16>
    %cst_22 = arith.constant dense<0.000000e+00> : vector<8x128xf32>
    %32 = tpu.matmul %30, %31, %cst_22 {dimension_numbers = #tpu.dot_dimension_numbers<[1], [0], [0], [1], [0, 0, 1, 1], [], []>} : vector<8x128xbf16>, vector<128x128xbf16>, vector<8x128xf32> -> vector<8x128xf32>
    %c0_23 = arith.constant 0 : index
    %c0_24 = arith.constant 0 : index
    %33 = vector.load %arg10[%c0_23, %c0_24] : memref<1x128xf32, #tpu.memory_space<vmem>>, vector<1x128xf32>
    %34 = vector.broadcast %33 : vector<1x128xf32> to vector<8x128xf32>
    %35 = arith.addf %32, %34 : vector<8x128xf32>
    %36 = arith.truncf %35 : vector<8x128xf32> to vector<8x128xbf16>
    %c0_25 = arith.constant 0 : index
    %c0_26 = arith.constant 0 : index
    %37 = vector.load %arg11[%c0_25, %c0_26] : memref<8x128xbf16, #tpu.memory_space<vmem>>, vector<8x128xbf16>
    tpu.vector_store %arg11[%c0_25, %c0_26], %36 {strides = array<i32>} : memref<8x128xbf16, #tpu.memory_space<vmem>>, vector<8x128xbf16>,
    %c0_27 = arith.constant 0 : index
    %c0_28 = arith.constant 0 : index
    %38 = vector.load %arg12[%c0_27, %c0_28] : memref<8x256xf32, #tpu.memory_space<vmem>>, vector<8x256xf32>
    tpu.vector_store %arg12[%c0_27, %c0_28], %13 {strides = array<i32>} : memref<8x256xf32, #tpu.memory_space<vmem>>, vector<8x256xf32>,
    return
  }
  func.func @transform_0(%arg0: i32) -> (i32, i32) {
    %c0_i32 = arith.constant 0 : i32
    %c0_i32_0 = arith.constant 0 : i32
    return %arg0, %c0_i32 : i32, i32
  }
  func.func @transform_1(%arg0: i32) -> (i32, i32) {
    %c0_i32 = arith.constant 0 : i32
    %c0_i32_0 = arith.constant 0 : i32
    return %arg0, %c0_i32 : i32, i32
  }
  func.func @transform_2(%arg0: i32) -> (i32, i32) {
    %c0_i32 = arith.constant 0 : i32
    %c0_i32_0 = arith.constant 0 : i32
    %c0_i32_1 = arith.constant 0 : i32
    return %c0_i32, %c0_i32_0 : i32, i32
  }
  func.func @transform_3(%arg0: i32) -> (i32, i32) {
    %c0_i32 = arith.constant 0 : i32
    %c0_i32_0 = arith.constant 0 : i32
    %c0_i32_1 = arith.constant 0 : i32
    return %c0_i32, %c0_i32_0 : i32, i32
  }
  func.func @transform_4(%arg0: i32) -> (i32, i32) {
    %c0_i32 = arith.constant 0 : i32
    %c0_i32_0 = arith.constant 0 : i32
    %c0_i32_1 = arith.constant 0 : i32
    return %c0_i32, %c0_i32_0 : i32, i32
  }
  func.func @transform_5(%arg0: i32) -> (i32, i32) {
    %c0_i32 = arith.constant 0 : i32
    %c0_i32_0 = arith.constant 0 : i32
    %c0_i32_1 = arith.constant 0 : i32
    return %c0_i32, %c0_i32_0 : i32, i32
  }
  func.func @transform_6(%arg0: i32) -> (i32, i32) {
    %c0_i32 = arith.constant 0 : i32
    %c0_i32_0 = arith.constant 0 : i32
    %c0_i32_1 = arith.constant 0 : i32
    return %c0_i32, %c0_i32_0 : i32, i32
  }
  func.func @transform_7(%arg0: i32) -> (i32, i32) {
    %c0_i32 = arith.constant 0 : i32
    %c0_i32_0 = arith.constant 0 : i32
    %c0_i32_1 = arith.constant 0 : i32
    return %c0_i32, %c0_i32_0 : i32, i32
  }
  func.func @transform_8(%arg0: i32) -> (i32, i32) {
    %c0_i32 = arith.constant 0 : i32
    %c0_i32_0 = arith.constant 0 : i32
    %c0_i32_1 = arith.constant 0 : i32
    return %c0_i32, %c0_i32_0 : i32, i32
  }
  func.func @transform_9(%arg0: i32) -> (i32, i32) {
    %c0_i32 = arith.constant 0 : i32
    %c0_i32_0 = arith.constant 0 : i32
    %c0_i32_1 = arith.constant 0 : i32
    return %c0_i32, %c0_i32_0 : i32, i32
  }
  func.func @transform_10(%arg0: i32) -> (i32, i32) {
    %c0_i32 = arith.constant 0 : i32
    %c0_i32_0 = arith.constant 0 : i32
    return %arg0, %c0_i32 : i32, i32
  }
  func.func @transform_11(%arg0: i32) -> (i32, i32) {
    %c0_i32 = arith.constant 0 : i32
    %c0_i32_0 = arith.constant 0 : i32
    return %arg0, %c0_i32 : i32, i32
  }
}

</mosaic_0001>

<llo_original>
// kernel: vae_forward.1
$region0: #{vae_forward.1}
  #allocation0 [shape = 'u32[]', space=smem, size = 0x4, offset = 0x4, fixed_abs, tag = 'smem constant byte address 0x4 - core index']
  #allocation1 [shape = 'u32[144,128]{1,0:T(1,128)}', space=vmem, size = 0x12000, scoped, tag = 'internal scratch']
  %s0 = inlined_call_operand.vmem [shape: bf16[8,128], index: 0, kind: input, shape index: {}]
  %s1 = inlined_call_operand.vmem [shape: f32[8,128], index: 1, kind: input, shape index: {}]
  %s2 = inlined_call_operand.hbm [shape: bf16[128,128], index: 2, kind: input, shape index: {}]
  %s3 = inlined_call_operand.vmem [shape: f32[1,128], index: 3, kind: input, shape index: {}]
  %s4 = inlined_call_operand.hbm [shape: bf16[128,256], index: 4, kind: input, shape index: {}]
  %s5 = inlined_call_operand.vmem [shape: f32[1,256], index: 5, kind: input, shape index: {}]
  %s6 = inlined_call_operand.hbm [shape: bf16[128,128], index: 6, kind: input, shape index: {}]
  %s7 = inlined_call_operand.vmem [shape: f32[1,128], index: 7, kind: input, shape index: {}]
  %s8 = inlined_call_operand.hbm [shape: bf16[128,128], index: 8, kind: input, shape index: {}]
  %s9 = inlined_call_operand.vmem [shape: f32[1,128], index: 9, kind: input, shape index: {}]
  %s10 = inlined_call_operand.vmem [shape: bf16[8,128], index: 10, kind: output, shape index: {0}]
  %s11 = inlined_call_operand.vmem [shape: f32[8,256], index: 11, kind: output, shape index: {1}]
  %12 = xla_tuple %s10, %s11
  %s13 = sld [smem:[#allocation0]]
  $region74: #{vae_forward.1} parent=0
    _
  %s15 = ssub.s32 1, %s13
  %s16 = scalar_select 0, %s15, %s13
  $region1: #{vae_forward.1} parent=0
    #allocation2 [shape = 'u8[32768]{0}', space=vmem, size = 0x8000, scoped, tag = 'input window, operand 2, single buffered']
    #allocation3 [shape = 's32[1]{0}', space=sflag, size = 0x4, scoped, tag = 'scoped memory for vae_forward.1']
    #allocation4 [shape = 'u8[65536]{0}', space=vmem, size = 0x10000, scoped, tag = 'input window, operand 4, single buffered']
    #allocation5 [shape = 's32[1]{0}', space=sflag, size = 0x4, scoped, tag = 'scoped memory for vae_forward.1']
    #allocation6 [shape = 'u8[32768]{0}', space=vmem, size = 0x8000, scoped, tag = 'input window, operand 6, single buffered']
    #allocation7 [shape = 'u8[32768]{0}', space=vmem, size = 0x8000, scoped, tag = 'input window, operand 8, single buffered']
    #allocation8 [shape = 's32[1]{0}', space=sflag, size = 0x4, scoped, tag = 'scoped memory for vae_forward.1']
    %17 = vsyncpa [#allocation3], 0
    %18 = vsyncpa [#allocation5], 0
    %19 = vsyncpa [#allocation8], 0
    // Predicated region
    $region2: #{vae_forward.1} parent=1 // pred_check
      _
    $region3: #{vae_forward.1} parent=1 // pred_check_branch
      %21 = sbr.rel (0) target = $region5
    $region4: #{vae_forward.1} parent=1 // pred_region
      _
    $region5: #{vae_forward.1} parent=1 // pred_fallthru
      _
    // Predicated region
    $region6: #{vae_forward.1} parent=1 // pred_check
      _
    $region7: #{vae_forward.1} parent=1 // pred_check_branch
      %23 = sbr.rel (0) target = $region9
    $region8: #{vae_forward.1} parent=1 // pred_region
      _
    $region9: #{vae_forward.1} parent=1 // pred_fallthru
      _
    // Predicated region
    $region10: #{vae_forward.1} parent=1 // pred_check
      _
    $region11: #{vae_forward.1} parent=1 // pred_check_branch
      %25 = sbr.rel (0) target = $region13
    $region12: #{vae_forward.1} parent=1 // pred_region
      %s27 = ssub.s32 1024, 1024
      %28 = vsyncadd [#allocation3], %s27
      %s29 = sshll.u32 [#allocation2], 4
      %s30 = int_to_ptr.vmem [resolvable:$true] %s29
      %35 = dma.hbm_to_vmem [thread:$0]  %s2, 1024, %s30, [#allocation3], 64, 64, 4
    $region13: #{vae_forward.1} parent=1 // pred_fallthru
      _
    // Predicated region
    $region14: #{vae_forward.1} parent=1 // pred_check
      _
    $region15: #{vae_forward.1} parent=1 // pred_check_branch
      %37 = sbr.rel (0) target = $region17
    $region16: #{vae_forward.1} parent=1 // pred_region
      _
    $region17: #{vae_forward.1} parent=1 // pred_fallthru
      _
    // Predicated region
    $region18: #{vae_forward.1} parent=1 // pred_check
      _
    $region19: #{vae_forward.1} parent=1 // pred_check_branch
      %39 = sbr.rel (0) target = $region21
    $region20: #{vae_forward.1} parent=1 // pred_region
      %s41 = ssub.s32 2048, 2048
      %42 = vsyncadd [#allocation5], %s41
      %s43 = sshll.u32 [#allocation4], 4
      %s44 = int_to_ptr.vmem [resolvable:$true] %s43
      %49 = dma.hbm_to_vmem [thread:$0]  %s4, 2048, %s44, [#allocation5], 128, 128, 8
    $region21: #{vae_forward.1} parent=1 // pred_fallthru
      _
    // Predicated region
    $region22: #{vae_forward.1} parent=1 // pred_check
      _
    $region23: #{vae_forward.1} parent=1 // pred_check_branch
      %51 = sbr.rel (0) target = $region25
    $region24: #{vae_forward.1} parent=1 // pred_region
      _
    $region25: #{vae_forward.1} parent=1 // pred_fallthru
      _
    // Predicated region
    $region26: #{vae_forward.1} parent=1 // pred_check
      _
    $region27: #{vae_forward.1} parent=1 // pred_check_branch
      %53 = sbr.rel (0) target = $region29
    $region28: #{vae_forward.1} parent=1 // pred_region
      %s55 = ssub.s32 1024, 1024
      %56 = vsyncadd [#allocation5], %s55
      %s57 = sshll.u32 [#allocation6], 4
      %s58 = int_to_ptr.vmem [resolvable:$true] %s57
      %63 = dma.hbm_to_vmem [thread:$0]  %s6, 1024, %s58, [#allocation5], 64, 64, 4
    $region29: #{vae_forward.1} parent=1 // pred_fallthru
      _
    // Predicated region
    $region30: #{vae_forward.1} parent=1 // pred_check
      _
    $region31: #{vae_forward.1} parent=1 // pred_check_branch
      %65 = sbr.rel (0) target = $region33
    $region32: #{vae_forward.1} parent=1 // pred_region
      _
    $region33: #{vae_forward.1} parent=1 // pred_fallthru
      _
    // Predicated region
    $region34: #{vae_forward.1} parent=1 // pred_check
      _
    $region35: #{vae_forward.1} parent=1 // pred_check_branch
      %67 = sbr.rel (0) target = $region37
    $region36: #{vae_forward.1} parent=1 // pred_region
      %s69 = ssub.s32 1024, 1024
      %70 = vsyncadd [#allocation8], %s69
      %s71 = sshll.u32 [#allocation7], 4
      %s72 = int_to_ptr.vmem [resolvable:$true] %s71
      %77 = dma.hbm_to_vmem [thread:$0]  %s8, 1024, %s72, [#allocation8], 64, 64, 4
    $region37: #{vae_forward.1} parent=1 // pred_fallthru
      _
    // Predicated region
    $region38: #{vae_forward.1} parent=1 // pred_check
      _
    $region39: #{vae_forward.1} parent=1 // pred_check_branch
      %79 = sbr.rel (0) target = $region41
    $region40: #{vae_forward.1} parent=1 // pred_region
      _
    $region41: #{vae_forward.1} parent=1 // pred_fallthru
      _
    // Predicated region
    $region42: #{vae_forward.1} parent=1 // pred_check
      _
    $region43: #{vae_forward.1} parent=1 // pred_check_branch
      %81 = sbr.rel (0) target = $region45
    $region44: #{vae_forward.1} parent=1 // pred_region
      %82 = dma.done [#allocation3], 1024
    $region45: #{vae_forward.1} parent=1 // pred_fallthru
      _
    // Predicated region
    $region46: #{vae_forward.1} parent=1 // pred_check
      _
    $region47: #{vae_forward.1} parent=1 // pred_check_branch
      %84 = sbr.rel (0) target = $region49
    $region48: #{vae_forward.1} parent=1 // pred_region
      %85 = dma.done [#allocation5], 2048
    $region49: #{vae_forward.1} parent=1 // pred_fallthru
      _
    // Predicated region
    $region50: #{vae_forward.1} parent=1 // pred_check
      _
    $region51: #{vae_forward.1} parent=1 // pred_check_branch
      %87 = sbr.rel (0) target = $region53
    $region52: #{vae_forward.1} parent=1 // pred_region
      %88 = dma.done [#allocation5], 1024
    $region53: #{vae_forward.1} parent=1 // pred_fallthru
      _
    // Predicated region
    $region54: #{vae_forward.1} parent=1 // pred_check
      _
    $region55: #{vae_forward.1} parent=1 // pred_check_branch
      %90 = sbr.rel (0) target = $region57
    $region56: #{vae_forward.1} parent=1 // pred_region
      %91 = dma.done [#allocation8], 1024
    $region57: #{vae_forward.1} parent=1 // pred_fallthru
      _
    %v93 = vld [vmem:[%s0] sm:$0xf]
    %v94 = vld [vmem:[#allocation2] sm:$0xf]
    %v95 = vld [vmem:[#allocation2 + $0x4] sm:$0xf]
    %v96 = vld [vmem:[#allocation2 + $0x8] sm:$0xf]
    %v97 = vld [vmem:[#allocation2 + $0xc] sm:$0xf]
    %v98 = vld [vmem:[#allocation2 + $0x10] sm:$0xf]
    %v99 = vld [vmem:[#allocation2 + $0x14] sm:$0xf]
    %v100 = vld [vmem:[#allocation2 + $0x18] sm:$0xf]
    %v101 = vld [vmem:[#allocation2 + $0x1c] sm:$0xf]
    %v102 = vld [vmem:[#allocation2 + $0x20] sm:$0xf]
    %v103 = vld [vmem:[#allocation2 + $0x24] sm:$0xf]
    %v104 = vld [vmem:[#allocation2 + $0x28] sm:$0xf]
    %v105 = vld [vmem:[#allocation2 + $0x2c] sm:$0xf]
    %v106 = vld [vmem:[#allocation2 + $0x30] sm:$0xf]
    %v107 = vld [vmem:[#allocation2 + $0x34] sm:$0xf]
    %v108 = vld [vmem:[#allocation2 + $0x38] sm:$0xf]
    %v109 = vld [vmem:[#allocation2 + $0x3c] sm:$0xf]
    %v110 = vld [vmem:[%s3] sm:$0x1]
    %v112 = vlaneseq
    %v113 = vshrl.u32 %v112, 7
    %v114 = vsub.s32 0, %v113
    %v115 = vrot.slane %v110, %v114
    %v133 = vunpack.c.l.b16 %v94
    %v134 = vunpack.c.l.b16 %v95
    %v135 = vunpack.c.l.b16 %v96
    %v136 = vunpack.c.l.b16 %v97
    %v137 = vunpack.c.l.b16 %v98
    %v138 = vunpack.c.l.b16 %v99
    %v139 = vunpack.c.l.b16 %v100
    %v140 = vunpack.c.l.b16 %v101
    %v141 = vunpack.c.l.b16 %v102
    %v142 = vunpack.c.l.b16 %v103
    %v143 = vunpack.c.l.b16 %v104
    %v144 = vunpack.c.l.b16 %v105
    %v145 = vunpack.c.l.b16 %v106
    %v146 = vunpack.c.l.b16 %v107
    %v147 = vunpack.c.l.b16 %v108
    %v148 = vunpack.c.l.b16 %v109
    %v149 = vpack.c.b16 %v134, %v133
    %v150 = vpack.c.b16 %v136, %v135
    %v151 = vpack.c.b16 %v138, %v137
    %v152 = vpack.c.b16 %v140, %v139
    %v153 = vpack.c.b16 %v142, %v141
    %v154 = vpack.c.b16 %v144, %v143
    %v155 = vpack.c.b16 %v146, %v145
    %v156 = vpack.c.b16 %v148, %v147
    %165 = vmatprep.subr.bf16.mxu0 0
    %166 = vmatpush1.bf16.msra.mxu0 %v149
    %167 = vmatprep.subr.bf16.mxu0 0
    %168 = vmatpush1.bf16.msra.mxu0 %v150
    %169 = vmatprep.subr.bf16.mxu0 0
    %170 = vmatpush1.bf16.msra.mxu0 %v151
    %171 = vmatprep.subr.bf16.mxu0 0
    %172 = vmatpush1.bf16.msra.mxu0 %v152
    %173 = vmatprep.subr.bf16.mxu0 0
    %174 = vmatpush1.bf16.msra.mxu0 %v153
    %175 = vmatprep.subr.bf16.mxu0 0
    %176 = vmatpush1.bf16.msra.mxu0 %v154
    %177 = vmatprep.subr.bf16.mxu0 0
    %178 = vmatpush1.bf16.msra.mxu0 %v155
    %179 = vmatprep.subr.bf16.mxu0 0
    %180 = vmatpush1.bf16.msra.mxu0 %v156
    %181 = vmatprep.subr.bf16.mxu0 0
    %182 = vmatpush1.bf16.msra.mxu0 0
    %183 = vmatprep.subr.bf16.mxu0 0
    %184 = vmatpush1.bf16.msra.mxu0 0
    %185 = vmatprep.subr.bf16.mxu0 0
    %186 = vmatpush1.bf16.msra.mxu0 0
    %187 = vmatprep.subr.bf16.mxu0 0
    %188 = vmatpush1.bf16.msra.mxu0 0
    %189 = vmatprep.subr.bf16.mxu0 0
    %190 = vmatpush1.bf16.msra.mxu0 0
    %191 = vmatprep.subr.bf16.mxu0 0
    %192 = vmatpush1.bf16.msra.mxu0 0
    %193 = vmatprep.subr.bf16.mxu0 0
    %194 = vmatpush1.bf16.msra.mxu0 0
    %195 = vmatprep.subr.bf16.mxu0 0
    %196 = vmatpush1.bf16.msra.mxu0 0
    %197 = vmatprep.mubr.bf16.mxu0 0
    %198 = vmatmul.mubr.bf16.gmra.mrb[0].mxu0 %v93
    %v199 = vpop.f32.mrb[0].mxu0
    %v200 = vadd.f32 %v115, %v199
    %v201 = vpop.f32.mrb[0].mxu0
    %v202 = vpop.f32.mrb[0].mxu0
    %v203 = vpop.f32.mrb[0].mxu0
    %204 = vdwg.mxu0
    %v205 = vmax.f32 %v200, 0.0
    %v206 = vpack.c.bf16 %v205, %v205
    %v207 = vld [vmem:[#allocation4] sm:$0xff]
    %v208 = vld [vmem:[#allocation4 + $0x8] sm:$0xff]
    %v209 = vld [vmem:[#allocation4 + $0x10] sm:$0xff]
    %v210 = vld [vmem:[#allocation4 + $0x18] sm:$0xff]
    %v211 = vld [vmem:[#allocation4 + $0x20] sm:$0xff]
    %v212 = vld [vmem:[#allocation4 + $0x28] sm:$0xff]
    %v213 = vld [vmem:[#allocation4 + $0x30] sm:$0xff]
    %v214 = vld [vmem:[#allocation4 + $0x38] sm:$0xff]
    %v215 = vld [vmem:[#allocation4 + $0x40] sm:$0xff]
    %v216 = vld [vmem:[#allocation4 + $0x48] sm:$0xff]
    %v217 = vld [vmem:[#allocation4 + $0x50] sm:$0xff]
    %v218 = vld [vmem:[#allocation4 + $0x58] sm:$0xff]
    %v219 = vld [vmem:[#allocation4 + $0x60] sm:$0xff]
    %v220 = vld [vmem:[#allocation4 + $0x68] sm:$0xff]
    %v221 = vld [vmem:[#allocation4 + $0x70] sm:$0xff]
    %v222 = vld [vmem:[#allocation4 + $0x78] sm:$0xff]
    %v223 = vld [vmem:[%s5] sm:$0x3]
    %v225 = vlaneseq
    %v226 = vshrl.u32 %v225, 7
    %v227 = vsub.s32 0, %v226
    %v228 = vrot.slane %v223, %v227
    %v229 = vlaneseq
    %v230 = vshrl.u32 %v229, 7
    %v231 = vsub.s32 1, %v230
    %v232 = vrot.slane %v223, %v231
    %v251 = vunpack.c.l.b16 %v207
    %v252 = vunpack.c.h.b16 %v207
    %v253 = vunpack.c.l.b16 %v208
    %v254 = vunpack.c.h.b16 %v208
    %v255 = vunpack.c.l.b16 %v209
    %v256 = vunpack.c.h.b16 %v209
    %v257 = vunpack.c.l.b16 %v210
    %v258 = vunpack.c.h.b16 %v210
    %v259 = vunpack.c.l.b16 %v211
    %v260 = vunpack.c.h.b16 %v211
    %v261 = vunpack.c.l.b16 %v212
    %v262 = vunpack.c.h.b16 %v212
    %v263 = vunpack.c.l.b16 %v213
    %v264 = vunpack.c.h.b16 %v213
    %v265 = vunpack.c.l.b16 %v214
    %v266 = vunpack.c.h.b16 %v214
    %v267 = vunpack.c.l.b16 %v215
    %v268 = vunpack.c.h.b16 %v215
    %v269 = vunpack.c.l.b16 %v216
    %v270 = vunpack.c.h.b16 %v216
    %v271 = vunpack.c.l.b16 %v217
    %v272 = vunpack.c.h.b16 %v217
    %v273 = vunpack.c.l.b16 %v218
    %v274 = vunpack.c.h.b16 %v218
    %v275 = vunpack.c.l.b16 %v219
    %v276 = vunpack.c.h.b16 %v219
    %v277 = vunpack.c.l.b16 %v220
    %v278 = vunpack.c.h.b16 %v220
    %v279 = vunpack.c.l.b16 %v221
    %v280 = vunpack.c.h.b16 %v221
    %v281 = vunpack.c.l.b16 %v222
    %v282 = vunpack.c.h.b16 %v222
    %v283 = vpack.c.b16 %v253, %v251
    %v284 = vpack.c.b16 %v254, %v252
    %v285 = vpack.c.b16 %v257, %v255
    %v286 = vpack.c.b16 %v258, %v256
    %v287 = vpack.c.b16 %v261, %v259
    %v288 = vpack.c.b16 %v262, %v260
    %v289 = vpack.c.b16 %v265, %v263
    %v290 = vpack.c.b16 %v266, %v264
    %v291 = vpack.c.b16 %v269, %v267
    %v292 = vpack.c.b16 %v270, %v268
    %v293 = vpack.c.b16 %v273, %v271
    %v294 = vpack.c.b16 %v274, %v272
    %v295 = vpack.c.b16 %v277, %v275
    %v296 = vpack.c.b16 %v278, %v276
    %v297 = vpack.c.b16 %v281, %v279
    %v298 = vpack.c.b16 %v282, %v280
    %315 = vmatprep.subr.bf16.mxu0 %v284
    %316 = vmatpush1.bf16.msra.mxu0 %v283
    %317 = vmatprep.subr.bf16.mxu0 %v286
    %318 = vmatpush1.bf16.msra.mxu0 %v285
    %319 = vmatprep.subr.bf16.mxu0 %v288
    %320 = vmatpush1.bf16.msra.mxu0 %v287
    %321 = vmatprep.subr.bf16.mxu0 %v290
    %322 = vmatpush1.bf16.msra.mxu0 %v289
    %323 = vmatprep.subr.bf16.mxu0 %v292
    %324 = vmatpush1.bf16.msra.mxu0 %v291
    %325 = vmatprep.subr.bf16.mxu0 %v294
    %326 = vmatpush1.bf16.msra.mxu0 %v293
    %327 = vmatprep.subr.bf16.mxu0 %v296
    %328 = vmatpush1.bf16.msra.mxu0 %v295
    %329 = vmatprep.subr.bf16.mxu0 %v298
    %330 = vmatpush1.bf16.msra.mxu0 %v297
    %331 = vmatprep.subr.bf16.mxu0 0
    %332 = vmatpush1.bf16.msra.mxu0 0
    %333 = vmatprep.subr.bf16.mxu0 0
    %334 = vmatpush1.bf16.msra.mxu0 0
    %335 = vmatprep.subr.bf16.mxu0 0
    %336 = vmatpush1.bf16.msra.mxu0 0
    %337 = vmatprep.subr.bf16.mxu0 0
    %338 = vmatpush1.bf16.msra.mxu0 0
    %339 = vmatprep.subr.bf16.mxu0 0
    %340 = vmatpush1.bf16.msra.mxu0 0
    %341 = vmatprep.subr.bf16.mxu0 0
    %342 = vmatpush1.bf16.msra.mxu0 0
    %343 = vmatprep.subr.bf16.mxu0 0
    %344 = vmatpush1.bf16.msra.mxu0 0
    %345 = vmatprep.subr.bf16.mxu0 0
    %346 = vmatpush1.bf16.msra.mxu0 0
    %347 = vmatprep.mubr.bf16.mxu0 0
    %348 = vmatmul.mubr.bf16.gmra.mrb[0].mxu0 %v206
    %v349 = vpop.f32.mrb[0].mxu0
    %v350 = vadd.f32 %v228, %v349
    %v351 = vpop.f32.mrb[0].mxu0
    %v352 = vadd.f32 %v232, %v351
    %v353 = vpop.f32.mrb[0].mxu0
    %v354 = vpop.f32.mrb[0].mxu0
    %355 = vdwg.mxu0
    %v356 = vmul.f32 %v352, 0.5
    %v357 = vmul.f32 %v356, 1.442695
    %v358 = vpow.pop %v357
    %v359 = vld [vmem:[%s1] sm:$0xff]
    %v360 = vmul.f32 %v359, %v358
    %v361 = vadd.f32 %v350, %v360
    %v362 = vpack.c.bf16 %v361, %v361
    %v363 = vld [vmem:[#allocation6] sm:$0xf]
    %v364 = vld [vmem:[#allocation6 + $0x4] sm:$0xf]
    %v365 = vld [vmem:[#allocation6 + $0x8] sm:$0xf]
    %v366 = vld [vmem:[#allocation6 + $0xc] sm:$0xf]
    %v367 = vld [vmem:[#allocation6 + $0x10] sm:$0xf]
    %v368 = vld [vmem:[#allocation6 + $0x14] sm:$0xf]
    %v369 = vld [vmem:[#allocation6 + $0x18] sm:$0xf]
    %v370 = vld [vmem:[#allocation6 + $0x1c] sm:$0xf]
    %v371 = vld [vmem:[#allocation6 + $0x20] sm:$0xf]
    %v372 = vld [vmem:[#allocation6 + $0x24] sm:$0xf]
    %v373 = vld [vmem:[#allocation6 + $0x28] sm:$0xf]
    %v374 = vld [vmem:[#allocation6 + $0x2c] sm:$0xf]
    %v375 = vld [vmem:[#allocation6 + $0x30] sm:$0xf]
    %v376 = vld [vmem:[#allocation6 + $0x34] sm:$0xf]
    %v377 = vld [vmem:[#allocation6 + $0x38] sm:$0xf]
    %v378 = vld [vmem:[#allocation6 + $0x3c] sm:$0xf]
    %v379 = vld [vmem:[%s7] sm:$0x1]
    %v381 = vlaneseq
    %v382 = vshrl.u32 %v381, 7
    %v383 = vsub.s32 0, %v382
    %v384 = vrot.slane %v379, %v383
    %v402 = vunpack.c.l.b16 %v363
    %v403 = vunpack.c.l.b16 %v364
    %v404 = vunpack.c.l.b16 %v365
    %v405 = vunpack.c.l.b16 %v366
    %v406 = vunpack.c.l.b16 %v367
    %v407 = vunpack.c.l.b16 %v368
    %v408 = vunpack.c.l.b16 %v369
    %v409 = vunpack.c.l.b16 %v370
    %v410 = vunpack.c.l.b16 %v371
    %v411 = vunpack.c.l.b16 %v372
    %v412 = vunpack.c.l.b16 %v373
    %v413 = vunpack.c.l.b16 %v374
    %v414 = vunpack.c.l.b16 %v375
    %v415 = vunpack.c.l.b16 %v376
    %v416 = vunpack.c.l.b16 %v377
    %v417 = vunpack.c.l.b16 %v378
    %v418 = vpack.c.b16 %v403, %v402
    %v419 = vpack.c.b16 %v405, %v404
    %v420 = vpack.c.b16 %v407, %v406
    %v421 = vpack.c.b16 %v409, %v408
    %v422 = vpack.c.b16 %v411, %v410
    %v423 = vpack.c.b16 %v413, %v412
    %v424 = vpack.c.b16 %v415, %v414
    %v425 = vpack.c.b16 %v417, %v416
    %434 = vmatprep.subr.bf16.mxu0 0
    %435 = vmatpush1.bf16.msra.mxu0 %v418
    %436 = vmatprep.subr.bf16.mxu0 0
    %437 = vmatpush1.bf16.msra.mxu0 %v419
    %438 = vmatprep.subr.bf16.mxu0 0
    %439 = vmatpush1.bf16.msra.mxu0 %v420
    %440 = vmatprep.subr.bf16.mxu0 0
    %441 = vmatpush1.bf16.msra.mxu0 %v421
    %442 = vmatprep.subr.bf16.mxu0 0
    %443 = vmatpush1.bf16.msra.mxu0 %v422
    %444 = vmatprep.subr.bf16.mxu0 0
    %445 = vmatpush1.bf16.msra.mxu0 %v423
    %446 = vmatprep.subr.bf16.mxu0 0
    %447 = vmatpush1.bf16.msra.mxu0 %v424
    %448 = vmatprep.subr.bf16.mxu0 0
    %449 = vmatpush1.bf16.msra.mxu0 %v425
    %450 = vmatprep.subr.bf16.mxu0 0
    %451 = vmatpush1.bf16.msra.mxu0 0
    %452 = vmatprep.subr.bf16.mxu0 0
    %453 = vmatpush1.bf16.msra.mxu0 0
    %454 = vmatprep.subr.bf16.mxu0 0
    %455 = vmatpush1.bf16.msra.mxu0 0
    %456 = vmatprep.subr.bf16.mxu0 0
    %457 = vmatpush1.bf16.msra.mxu0 0
    %458 = vmatprep.subr.bf16.mxu0 0
    %459 = vmatpush1.bf16.msra.mxu0 0
    %460 = vmatprep.subr.bf16.mxu0 0
    %461 = vmatpush1.bf16.msra.mxu0 0
    %462 = vmatprep.subr.bf16.mxu0 0
    %463 = vmatpush1.bf16.msra.mxu0 0
    %464 = vmatprep.subr.bf16.mxu0 0
    %465 = vmatpush1.bf16.msra.mxu0 0
    %466 = vmatprep.mubr.bf16.mxu0 0
    %467 = vmatmul.mubr.bf16.gmra.mrb[0].mxu0 %v362
    %v468 = vpop.f32.mrb[0].mxu0
    %v469 = vadd.f32 %v384, %v468
    %v470 = vpop.f32.mrb[0].mxu0
    %v471 = vpop.f32.mrb[0].mxu0
    %v472 = vpop.f32.mrb[0].mxu0
    %473 = vdwg.mxu0
    %v474 = vmax.f32 %v469, 0.0
    %v475 = vpack.c.bf16 %v474, %v474
    %v476 = vld [vmem:[#allocation7] sm:$0xf]
    %v477 = vld [vmem:[#allocation7 + $0x4] sm:$0xf]
    %v478 = vld [vmem:[#allocation7 + $0x8] sm:$0xf]
    %v479 = vld [vmem:[#allocation7 + $0xc] sm:$0xf]
    %v480 = vld [vmem:[#allocation7 + $0x10] sm:$0xf]
    %v481 = vld [vmem:[#allocation7 + $0x14] sm:$0xf]
    %v482 = vld [vmem:[#allocation7 + $0x18] sm:$0xf]
    %v483 = vld [vmem:[#allocation7 + $0x1c] sm:$0xf]
    %v484 = vld [vmem:[#allocation7 + $0x20] sm:$0xf]
    %v485 = vld [vmem:[#allocation7 + $0x24] sm:$0xf]
    %v486 = vld [vmem:[#allocation7 + $0x28] sm:$0xf]
    %v487 = vld [vmem:[#allocation7 + $0x2c] sm:$0xf]
    %v488 = vld [vmem:[#allocation7 + $0x30] sm:$0xf]
    %v489 = vld [vmem:[#allocation7 + $0x34] sm:$0xf]
    %v490 = vld [vmem:[#allocation7 + $0x38] sm:$0xf]
    %v491 = vld [vmem:[#allocation7 + $0x3c] sm:$0xf]
    %v492 = vld [vmem:[%s9] sm:$0x1]
    %v494 = vlaneseq
    %v495 = vshrl.u32 %v494, 7
    %v496 = vsub.s32 0, %v495
    %v497 = vrot.slane %v492, %v496
    %v515 = vunpack.c.l.b16 %v476
    %v516 = vunpack.c.l.b16 %v477
    %v517 = vunpack.c.l.b16 %v478
    %v518 = vunpack.c.l.b16 %v479
    %v519 = vunpack.c.l.b16 %v480
    %v520 = vunpack.c.l.b16 %v481
    %v521 = vunpack.c.l.b16 %v482
    %v522 = vunpack.c.l.b16 %v483
    %v523 = vunpack.c.l.b16 %v484
    %v524 = vunpack.c.l.b16 %v485
    %v525 = vunpack.c.l.b16 %v486
    %v526 = vunpack.c.l.b16 %v487
    %v527 = vunpack.c.l.b16 %v488
    %v528 = vunpack.c.l.b16 %v489
    %v529 = vunpack.c.l.b16 %v490
    %v530 = vunpack.c.l.b16 %v491
    %v531 = vpack.c.b16 %v516, %v515
    %v532 = vpack.c.b16 %v518, %v517
    %v533 = vpack.c.b16 %v520, %v519
    %v534 = vpack.c.b16 %v522, %v521
    %v535 = vpack.c.b16 %v524, %v523
    %v536 = vpack.c.b16 %v526, %v525
    %v537 = vpack.c.b16 %v528, %v527
    %v538 = vpack.c.b16 %v530, %v529
    %547 = vmatprep.subr.bf16.mxu0 0
    %548 = vmatpush1.bf16.msra.mxu0 %v531
    %549 = vmatprep.subr.bf16.mxu0 0
    %550 = vmatpush1.bf16.msra.mxu0 %v532
    %551 = vmatprep.subr.bf16.mxu0 0
    %552 = vmatpush1.bf16.msra.mxu0 %v533
    %553 = vmatprep.subr.bf16.mxu0 0
    %554 = vmatpush1.bf16.msra.mxu0 %v534
    %555 = vmatprep.subr.bf16.mxu0 0
    %556 = vmatpush1.bf16.msra.mxu0 %v535
    %557 = vmatprep.subr.bf16.mxu0 0
    %558 = vmatpush1.bf16.msra.mxu0 %v536
    %559 = vmatprep.subr.bf16.mxu0 0
    %560 = vmatpush1.bf16.msra.mxu0 %v537
    %561 = vmatprep.subr.bf16.mxu0 0
    %562 = vmatpush1.bf16.msra.mxu0 %v538
    %563 = vmatprep.subr.bf16.mxu0 0
    %564 = vmatpush1.bf16.msra.mxu0 0
    %565 = vmatprep.subr.bf16.mxu0 0
    %566 = vmatpush1.bf16.msra.mxu0 0
    %567 = vmatprep.subr.bf16.mxu0 0
    %568 = vmatpush1.bf16.msra.mxu0 0
    %569 = vmatprep.subr.bf16.mxu0 0
    %570 = vmatpush1.bf16.msra.mxu0 0
    %571 = vmatprep.subr.bf16.mxu0 0
    %572 = vmatpush1.bf16.msra.mxu0 0
    %573 = vmatprep.subr.bf16.mxu0 0
    %574 = vmatpush1.bf16.msra.mxu0 0
    %575 = vmatprep.subr.bf16.mxu0 0
    %576 = vmatpush1.bf16.msra.mxu0 0
    %577 = vmatprep.subr.bf16.mxu0 0
    %578 = vmatpush1.bf16.msra.mxu0 0
    %579 = vmatprep.mubr.bf16.mxu0 0
    %580 = vmatmul.mubr.bf16.gmra.mrb[0].mxu0 %v475
    %v581 = vpop.f32.mrb[0].mxu0
    %v582 = vadd.f32 %v497, %v581
    %v583 = vpop.f32.mrb[0].mxu0
    %v584 = vpop.f32.mrb[0].mxu0
    %v585 = vpop.f32.mrb[0].mxu0
    %586 = vdwg.mxu0
    %v587 = vpack.c.bf16 %v582, %v582
    %588 = vst [vmem:[%s10] sm:$0xf] %v587
    %589 = vst [vmem:[%s11] sm:$0xff] %v350
    %590 = vst [vmem:[%s11 + $0x8] sm:$0xff] %v352
    // Predicated region
    $region58: #{vae_forward.1} parent=1 // pred_check
      _
    $region59: #{vae_forward.1} parent=1 // pred_check_branch
      %592 = sbr.rel (0) target = $region61
    $region60: #{vae_forward.1} parent=1 // pred_region
      _
    $region61: #{vae_forward.1} parent=1 // pred_fallthru
      _
    // Predicated region
    $region62: #{vae_forward.1} parent=1 // pred_check
      _
    $region63: #{vae_forward.1} parent=1 // pred_check_branch
      %594 = sbr.rel (0) target = $region65
    $region64: #{vae_forward.1} parent=1 // pred_region
      _
    $region65: #{vae_forward.1} parent=1 // pred_fallthru
      _
    // Predicated region
    $region66: #{vae_forward.1} parent=1 // pred_check
      _
    $region67: #{vae_forward.1} parent=1 // pred_check_branch
      %596 = sbr.rel (0) target = $region69
    $region68: #{vae_forward.1} parent=1 // pred_region
      _
    $region69: #{vae_forward.1} parent=1 // pred_fallthru
      _
    // Predicated region
    $region70: #{vae_forward.1} parent=1 // pred_check
      _
    $region71: #{vae_forward.1} parent=1 // pred_check_branch
      %598 = sbr.rel (0) target = $region73
    $region72: #{vae_forward.1} parent=1 // pred_region
      _
    $region73: #{vae_forward.1} parent=1 // pred_fallthru
      _
    %599 = vsyncpa [#allocation3], 1
    %600 = vsyncpa [#allocation5], 1
    %601 = vsyncpa [#allocation8], 1

</llo_original>
